<compile_context>
chip_gen: v6e
topology: v6e:2x2x1
jax: 0.10.0
libtpu: 0.0.40
codegen_flags: <defaults>
</compile_context>

<pallas_src>
import functools

import jax
import jax.numpy as jnp
from jax.experimental import pallas as pl
from jax.experimental.pallas import tpu as pltpu

HIDDEN = 128


def _round_up(v, m):
    return ((v + m - 1) // m) * m


def qnet5_kernel(x_ref, w1_ref, b1_ref, w2_ref, b2_ref,
                 w3_ref, b3_ref, w4_ref, b4_ref, o_ref):
    # Layer 1: Linear(n_input_pad, 128) + ReLU   (bf16 inputs, f32 accumulate)
    h = jnp.dot(x_ref[...], w1_ref[...], preferred_element_type=jnp.float32)
    h = jnp.maximum(h + b1_ref[...], 0.0).astype(jnp.bfloat16)
    # Layer 2: Linear(128, 128) + ReLU
    h = jnp.dot(h, w2_ref[...], preferred_element_type=jnp.float32)
    h = jnp.maximum(h + b2_ref[...], 0.0).astype(jnp.bfloat16)
    # Layer 3: Linear(128, 128) + ReLU
    h = jnp.dot(h, w3_ref[...], preferred_element_type=jnp.float32)
    h = jnp.maximum(h + b3_ref[...], 0.0).astype(jnp.bfloat16)
    # Layer 4: Linear(128, n_output_pad), no activation; lane-dense f32 store.
    out = jnp.dot(h, w4_ref[...], preferred_element_type=jnp.float32)
    o_ref[...] = (out + b4_ref[...]).astype(o_ref.dtype)


@functools.partial(jax.jit, static_argnames=("max_tile",))
def qnetwork5_forward(x, params, *, max_tile=512):
    """x: (B, n_input) float32. params: dict of f32 weights/biases.

    Returns (B, n_output) float32, matching
    MLP(x) = relu(relu(relu(x W1 + b1) W2 + b2) W3 + b3) W4 + b4.
    """
    B, n_input = x.shape
    n_output = params["w4"].shape[1]

    # ---- padded problem dimensions (lane-dense layouts) -------------------
    K_pad = _round_up(n_input, 128)          # input features -> lane-dense
    N_pad = _round_up(n_output, 128)         # output columns -> lane-dense
    TB = min(max_tile, _round_up(B, 8))      # batch tile (multiple of 8)
    B_pad = _round_up(B, TB)
    grid = (B_pad // TB,)

    # ---- one-time data prep (outside the kernel) --------------------------
    # Pad + cast x to bf16. Zero-padded rows/cols are inert (zero W1 rows).
    x_p = jnp.zeros((B_pad, K_pad), jnp.bfloat16)
    x_p = x_p.at[:B, :n_input].set(x.astype(jnp.bfloat16))

    # Weights: bf16, zero-padded where needed. Biases: f32 (elementwise f32).
    w1 = jnp.zeros((K_pad, HIDDEN), jnp.bfloat16).at[:n_input, :].set(
        params["w1"].astype(jnp.bfloat16))
    w2 = params["w2"].astype(jnp.bfloat16)
    w3 = params["w3"].astype(jnp.bfloat16)
    w4 = jnp.zeros((HIDDEN, N_pad), jnp.bfloat16).at[:, :n_output].set(
        params["w4"].astype(jnp.bfloat16))
    b1 = params["b1"].reshape(1, HIDDEN).astype(jnp.float32)
    b2 = params["b2"].reshape(1, HIDDEN).astype(jnp.float32)
    b3 = params["b3"].reshape(1, HIDDEN).astype(jnp.float32)
    b4 = jnp.zeros((1, N_pad), jnp.float32).at[:, :n_output].set(
        params["b4"].reshape(1, n_output).astype(jnp.float32))

    # ---- BlockSpecs --------------------------------------------------------
    const = lambda i: (0, 0)  # weights/biases: resident, fetched once
    in_specs = [
        pl.BlockSpec((TB, K_pad), lambda i: (i, 0)),        # x tile (streamed)
        pl.BlockSpec((K_pad, HIDDEN), const),               # w1
        pl.BlockSpec((1, HIDDEN), const),                   # b1
        pl.BlockSpec((HIDDEN, HIDDEN), const),              # w2
        pl.BlockSpec((1, HIDDEN), const),                   # b2
        pl.BlockSpec((HIDDEN, HIDDEN), const),              # w3
        pl.BlockSpec((1, HIDDEN), const),                   # b3
        pl.BlockSpec((HIDDEN, N_pad), const),               # w4
        pl.BlockSpec((1, N_pad), const),                    # b4
    ]
    out_spec = pl.BlockSpec((TB, N_pad), lambda i: (i, 0))   # lane-dense store

    # ---- cost hint for the XLA scheduler -----------------------------------
    flops = 2 * B_pad * (K_pad * HIDDEN + 2 * HIDDEN * HIDDEN + HIDDEN * N_pad)
    bytes_accessed = (
        B_pad * K_pad * 2                      # x (bf16)
        + B_pad * N_pad * 4                    # out (f32)
        + (K_pad * HIDDEN + 2 * HIDDEN * HIDDEN + HIDDEN * N_pad) * 2  # weights
        + (3 * HIDDEN + N_pad) * 4             # biases
    )
    cost = pl.CostEstimate(flops=flops, transcendentals=0,
                           bytes_accessed=bytes_accessed)

    out_p = pl.pallas_call(
        qnet5_kernel,
        out_shape=jax.ShapeDtypeStruct((B_pad, N_pad), jnp.float32),
        grid=grid,
        in_specs=in_specs,
        out_specs=out_spec,
        compiler_params=pltpu.CompilerParams(
            dimension_semantics=("parallel",)),
        cost_estimate=cost,
    )(x_p, w1, b1, w2, b2, w3, b3, w4, b4)

    return out_p[:B, :n_output]


def init_params(key, n_input, n_output, hidden=HIDDEN):
    """Deterministic init mimicking torch.nn.Linear default:
    U(-1/sqrt(fan_in), 1/sqrt(fan_in)) for both weight and bias.
    Weights stored (in_features, out_features) so forward is x @ W + b."""
    dims = [(n_input, hidden), (hidden, hidden), (hidden, hidden), (hidden, n_output)]
    params = {}
    for i, (fan_in, fan_out) in enumerate(dims, start=1):
        key, kw, kb = jax.random.split(key, 3)
        bound = 1.0 / jnp.sqrt(jnp.float32(fan_in))
        params[f"w{i}"] = jax.random.uniform(
            kw, (fan_in, fan_out), jnp.float32, minval=-bound, maxval=bound)
        params[f"b{i}"] = jax.random.uniform(
            kb, (1, fan_out), jnp.float32, minval=-bound, maxval=bound)
    return params


def reference_forward(x, params):
    h = jnp.maximum(x @ params["w1"] + params["b1"], 0.0)
    h = jnp.maximum(h @ params["w2"] + params["b2"], 0.0)
    h = jnp.maximum(h @ params["w3"] + params["b3"], 0.0)
    return h @ params["w4"] + params["b4"]


if __name__ == "__main__":
    key = jax.random.PRNGKey(0)
    n_input, n_output, batch = 8, 4, 2

    key, kx, kp = jax.random.split(key, 3)
    x = jax.random.normal(kx, (batch, n_input), jnp.float32)
    params = init_params(kp, n_input, n_output)

    out = qnetwork5_forward(x, params)
    jax.block_until_ready(out)

    ref = reference_forward(x, params)
    assert out.shape == (batch, n_output)
    # bf16 weights/activations with f32 accumulation -> relaxed tolerance.
    assert jnp.allclose(out, ref, atol=5e-2, rtol=5e-2), "mismatch vs reference"

    # Also exercise a larger, non-tile-multiple batch to check the grid path.
    key, kx2 = jax.random.split(key)
    x_big = jax.random.normal(kx2, (1000, n_input), jnp.float32)
    out_big = qnetwork5_forward(x_big, params)
    jax.block_until_ready(out_big)
    ref_big = reference_forward(x_big, params)
    assert out_big.shape == (1000, n_output)
    assert jnp.allclose(out_big, ref_big, atol=5e-2, rtol=5e-2), "mismatch (big batch)"

    print("KERNEL_OK")
</pallas_src>

<mosaic_0001>
module attributes {stable_mosaic.version = 11 : i64} {
  func.func @qnet5_kernel(%arg0: i32, %arg1: memref<8x128xbf16, #tpu.memory_space<vmem>>, %arg2: memref<128x128xbf16, #tpu.memory_space<vmem>>, %arg3: memref<1x128xf32, #tpu.memory_space<vmem>>, %arg4: memref<128x128xbf16, #tpu.memory_space<vmem>>, %arg5: memref<1x128xf32, #tpu.memory_space<vmem>>, %arg6: memref<128x128xbf16, #tpu.memory_space<vmem>>, %arg7: memref<1x128xf32, #tpu.memory_space<vmem>>, %arg8: memref<128x128xbf16, #tpu.memory_space<vmem>>, %arg9: memref<1x128xf32, #tpu.memory_space<vmem>>, %arg10: memref<8x128xf32, #tpu.memory_space<vmem>>) attributes {dimension_semantics = [#tpu.dimension_semantics<parallel>], iteration_bounds = array<i64: 1>, scalar_prefetch = 0 : i64, scratch_operands = 0 : i64, tpu.core_type = #tpu.core_type<tc>, window_params = [{transform_indices = @transform_0, window_bounds = array<i64: 8, 128>}, {pipeline_mode = #tpu.pipeline_mode<synchronous>, transform_indices = @transform_1, window_bounds = array<i64: 128, 128>}, {pipeline_mode = #tpu.pipeline_mode<synchronous>, transform_indices = @transform_2, window_bounds = array<i64: 1, 128>}, {pipeline_mode = #tpu.pipeline_mode<synchronous>, transform_indices = @transform_3, window_bounds = array<i64: 128, 128>}, {pipeline_mode = #tpu.pipeline_mode<synchronous>, transform_indices = @transform_4, window_bounds = array<i64: 1, 128>}, {pipeline_mode = #tpu.pipeline_mode<synchronous>, transform_indices = @transform_5, window_bounds = array<i64: 128, 128>}, {pipeline_mode = #tpu.pipeline_mode<synchronous>, transform_indices = @transform_6, window_bounds = array<i64: 1, 128>}, {pipeline_mode = #tpu.pipeline_mode<synchronous>, transform_indices = @transform_7, window_bounds = array<i64: 128, 128>}, {pipeline_mode = #tpu.pipeline_mode<synchronous>, transform_indices = @transform_8, window_bounds = array<i64: 1, 128>}, {transform_indices = @transform_9, window_bounds = array<i64: 8, 128>}]} {
    %c0 = arith.constant 0 : index
    %c0_0 = arith.constant 0 : index
    %0 = vector.load %arg1[%c0, %c0_0] : memref<8x128xbf16, #tpu.memory_space<vmem>>, vector<8x128xbf16>
    %c0_1 = arith.constant 0 : index
    %c0_2 = arith.constant 0 : index
    %1 = vector.load %arg2[%c0_1, %c0_2] : memref<128x128xbf16, #tpu.memory_space<vmem>>, vector<128x128xbf16>
    %cst = arith.constant dense<0.000000e+00> : vector<8x128xf32>
    %2 = tpu.matmul %0, %1, %cst {dimension_numbers = #tpu.dot_dimension_numbers<[1], [0], [0], [1], [0, 0, 1, 1], [], []>} : vector<8x128xbf16>, vector<128x128xbf16>, vector<8x128xf32> -> vector<8x128xf32>
    %c0_3 = arith.constant 0 : index
    %c0_4 = arith.constant 0 : index
    %3 = vector.load %arg3[%c0_3, %c0_4] : memref<1x128xf32, #tpu.memory_space<vmem>>, vector<1x128xf32>
    %4 = vector.broadcast %3 : vector<1x128xf32> to vector<8x128xf32>
    %5 = arith.addf %2, %4 : vector<8x128xf32>
    %cst_5 = arith.constant 0.000000e+00 : f32
    %6 = vector.broadcast %cst_5 : f32 to vector<8x128xf32>
    %7 = arith.maximumf %5, %6 : vector<8x128xf32>
    %8 = arith.truncf %7 : vector<8x128xf32> to vector<8x128xbf16>
    %c0_6 = arith.constant 0 : index
    %c0_7 = arith.constant 0 : index
    %9 = vector.load %arg4[%c0_6, %c0_7] : memref<128x128xbf16, #tpu.memory_space<vmem>>, vector<128x128xbf16>
    %cst_8 = arith.constant dense<0.000000e+00> : vector<8x128xf32>
    %10 = tpu.matmul %8, %9, %cst_8 {dimension_numbers = #tpu.dot_dimension_numbers<[1], [0], [0], [1], [0, 0, 1, 1], [], []>} : vector<8x128xbf16>, vector<128x128xbf16>, vector<8x128xf32> -> vector<8x128xf32>
    %c0_9 = arith.constant 0 : index
    %c0_10 = arith.constant 0 : index
    %11 = vector.load %arg5[%c0_9, %c0_10] : memref<1x128xf32, #tpu.memory_space<vmem>>, vector<1x128xf32>
    %12 = vector.broadcast %11 : vector<1x128xf32> to vector<8x128xf32>
    %13 = arith.addf %10, %12 : vector<8x128xf32>
    %cst_11 = arith.constant 0.000000e+00 : f32
    %14 = vector.broadcast %cst_11 : f32 to vector<8x128xf32>
    %15 = arith.maximumf %13, %14 : vector<8x128xf32>
    %16 = arith.truncf %15 : vector<8x128xf32> to vector<8x128xbf16>
    %c0_12 = arith.constant 0 : index
    %c0_13 = arith.constant 0 : index
    %17 = vector.load %arg6[%c0_12, %c0_13] : memref<128x128xbf16, #tpu.memory_space<vmem>>, vector<128x128xbf16>
    %cst_14 = arith.constant dense<0.000000e+00> : vector<8x128xf32>
    %18 = tpu.matmul %16, %17, %cst_14 {dimension_numbers = #tpu.dot_dimension_numbers<[1], [0], [0], [1], [0, 0, 1, 1], [], []>} : vector<8x128xbf16>, vector<128x128xbf16>, vector<8x128xf32> -> vector<8x128xf32>
    %c0_15 = arith.constant 0 : index
    %c0_16 = arith.constant 0 : index
    %19 = vector.load %arg7[%c0_15, %c0_16] : memref<1x128xf32, #tpu.memory_space<vmem>>, vector<1x128xf32>
    %20 = vector.broadcast %19 : vector<1x128xf32> to vector<8x128xf32>
    %21 = arith.addf %18, %20 : vector<8x128xf32>
    %cst_17 = arith.constant 0.000000e+00 : f32
    %22 = vector.broadcast %cst_17 : f32 to vector<8x128xf32>
    %23 = arith.maximumf %21, %22 : vector<8x128xf32>
    %24 = arith.truncf %23 : vector<8x128xf32> to vector<8x128xbf16>
    %c0_18 = arith.constant 0 : index
    %c0_19 = arith.constant 0 : index
    %25 = vector.load %arg8[%c0_18, %c0_19] : memref<128x128xbf16, #tpu.memory_space<vmem>>, vector<128x128xbf16>
    %cst_20 = arith.constant dense<0.000000e+00> : vector<8x128xf32>
    %26 = tpu.matmul %24, %25, %cst_20 {dimension_numbers = #tpu.dot_dimension_numbers<[1], [0], [0], [1], [0, 0, 1, 1], [], []>} : vector<8x128xbf16>, vector<128x128xbf16>, vector<8x128xf32> -> vector<8x128xf32>
    %c0_21 = arith.constant 0 : index
    %c0_22 = arith.constant 0 : index
    %27 = vector.load %arg9[%c0_21, %c0_22] : memref<1x128xf32, #tpu.memory_space<vmem>>, vector<1x128xf32>
    %28 = vector.broadcast %27 : vector<1x128xf32> to vector<8x128xf32>
    %29 = arith.addf %26, %28 : vector<8x128xf32>
    %c0_23 = arith.constant 0 : index
    %c0_24 = arith.constant 0 : index
    %30 = vector.load %arg10[%c0_23, %c0_24] : memref<8x128xf32, #tpu.memory_space<vmem>>, vector<8x128xf32>
    tpu.vector_store %arg10[%c0_23, %c0_24], %29 {strides = array<i32>} : memref<8x128xf32, #tpu.memory_space<vmem>>, vector<8x128xf32>,
    return
  }
  func.func @transform_0(%arg0: i32) -> (i32, i32) {
    %c0_i32 = arith.constant 0 : i32
    %c0_i32_0 = arith.constant 0 : i32
    return %arg0, %c0_i32 : i32, i32
  }
  func.func @transform_1(%arg0: i32) -> (i32, i32) {
    %c0_i32 = arith.constant 0 : i32
    %c0_i32_0 = arith.constant 0 : i32
    %c0_i32_1 = arith.constant 0 : i32
    return %c0_i32, %c0_i32_0 : i32, i32
  }
  func.func @transform_2(%arg0: i32) -> (i32, i32) {
    %c0_i32 = arith.constant 0 : i32
    %c0_i32_0 = arith.constant 0 : i32
    %c0_i32_1 = arith.constant 0 : i32
    return %c0_i32, %c0_i32_0 : i32, i32
  }
  func.func @transform_3(%arg0: i32) -> (i32, i32) {
    %c0_i32 = arith.constant 0 : i32
    %c0_i32_0 = arith.constant 0 : i32
    %c0_i32_1 = arith.constant 0 : i32
    return %c0_i32, %c0_i32_0 : i32, i32
  }
  func.func @transform_4(%arg0: i32) -> (i32, i32) {
    %c0_i32 = arith.constant 0 : i32
    %c0_i32_0 = arith.constant 0 : i32
    %c0_i32_1 = arith.constant 0 : i32
    return %c0_i32, %c0_i32_0 : i32, i32
  }
  func.func @transform_5(%arg0: i32) -> (i32, i32) {
    %c0_i32 = arith.constant 0 : i32
    %c0_i32_0 = arith.constant 0 : i32
    %c0_i32_1 = arith.constant 0 : i32
    return %c0_i32, %c0_i32_0 : i32, i32
  }
  func.func @transform_6(%arg0: i32) -> (i32, i32) {
    %c0_i32 = arith.constant 0 : i32
    %c0_i32_0 = arith.constant 0 : i32
    %c0_i32_1 = arith.constant 0 : i32
    return %c0_i32, %c0_i32_0 : i32, i32
  }
  func.func @transform_7(%arg0: i32) -> (i32, i32) {
    %c0_i32 = arith.constant 0 : i32
    %c0_i32_0 = arith.constant 0 : i32
    %c0_i32_1 = arith.constant 0 : i32
    return %c0_i32, %c0_i32_0 : i32, i32
  }
  func.func @transform_8(%arg0: i32) -> (i32, i32) {
    %c0_i32 = arith.constant 0 : i32
    %c0_i32_0 = arith.constant 0 : i32
    %c0_i32_1 = arith.constant 0 : i32
    return %c0_i32, %c0_i32_0 : i32, i32
  }
  func.func @transform_9(%arg0: i32) -> (i32, i32) {
    %c0_i32 = arith.constant 0 : i32
    %c0_i32_0 = arith.constant 0 : i32
    return %arg0, %c0_i32 : i32, i32
  }
}

</mosaic_0001>

<llo_original>
// kernel: qnetwork5_forward.1
$region0: #{qnetwork5_forward.1}
  #allocation0 [shape = 'u32[]', space=smem, size = 0x4, offset = 0x4, fixed_abs, tag = 'smem constant byte address 0x4 - core index']
  #allocation1 [shape = 'u32[144,128]{1,0:T(1,128)}', space=vmem, size = 0x12000, scoped, tag = 'internal scratch']
  %s0 = inlined_call_operand.vmem [shape: bf16[8,128], index: 0, kind: input, shape index: {}]
  %s1 = inlined_call_operand.vmem [shape: bf16[128,128], index: 1, kind: input, shape index: {}]
  %s2 = inlined_call_operand.vmem [shape: f32[1,128], index: 2, kind: input, shape index: {}]
  %s3 = inlined_call_operand.vmem [shape: bf16[128,128], index: 3, kind: input, shape index: {}]
  %s4 = inlined_call_operand.vmem [shape: f32[1,128], index: 4, kind: input, shape index: {}]
  %s5 = inlined_call_operand.vmem [shape: bf16[128,128], index: 5, kind: input, shape index: {}]
  %s6 = inlined_call_operand.vmem [shape: f32[1,128], index: 6, kind: input, shape index: {}]
  %s7 = inlined_call_operand.vmem [shape: bf16[128,128], index: 7, kind: input, shape index: {}]
  %s8 = inlined_call_operand.vmem [shape: f32[1,128], index: 8, kind: input, shape index: {}]
  %s9 = inlined_call_operand.vmem [shape: f32[8,128], index: 9, kind: output, shape index: {}]
  %s10 = sld [smem:[#allocation0]]
  $region46: #{qnetwork5_forward.1} parent=0
    _
  %s12 = ssub.s32 1, %s10
  %s13 = scalar_select 0, %s12, %s10
  // Predicated region
  $region2: #{qnetwork5_forward.1} parent=0 // pred_check
    _
  $region3: #{qnetwork5_forward.1} parent=0 // pred_check_branch
    %15 = sbr.rel (0) target = $region5
  $region4: #{qnetwork5_forward.1} parent=0 // pred_region
    _
  $region5: #{qnetwork5_forward.1} parent=0 // pred_fallthru
    _
  // Predicated region
  $region6: #{qnetwork5_forward.1} parent=0 // pred_check
    _
  $region7: #{qnetwork5_forward.1} parent=0 // pred_check_branch
    %17 = sbr.rel (0) target = $region9
  $region8: #{qnetwork5_forward.1} parent=0 // pred_region
    _
  $region9: #{qnetwork5_forward.1} parent=0 // pred_fallthru
    _
  // Predicated region
  $region10: #{qnetwork5_forward.1} parent=0 // pred_check
    _
  $region11: #{qnetwork5_forward.1} parent=0 // pred_check_branch
    %19 = sbr.rel (0) target = $region13
  $region12: #{qnetwork5_forward.1} parent=0 // pred_region
    _
  $region13: #{qnetwork5_forward.1} parent=0 // pred_fallthru
    _
  // Predicated region
  $region14: #{qnetwork5_forward.1} parent=0 // pred_check
    _
  $region15: #{qnetwork5_forward.1} parent=0 // pred_check_branch
    %21 = sbr.rel (0) target = $region17
  $region16: #{qnetwork5_forward.1} parent=0 // pred_region
    _
  $region17: #{qnetwork5_forward.1} parent=0 // pred_fallthru
    _
  // Predicated region
  $region18: #{qnetwork5_forward.1} parent=0 // pred_check
    _
  $region19: #{qnetwork5_forward.1} parent=0 // pred_check_branch
    %23 = sbr.rel (0) target = $region21
  $region20: #{qnetwork5_forward.1} parent=0 // pred_region
    _
  $region21: #{qnetwork5_forward.1} parent=0 // pred_fallthru
    _
  // Predicated region
  $region22: #{qnetwork5_forward.1} parent=0 // pred_check
    _
  $region23: #{qnetwork5_forward.1} parent=0 // pred_check_branch
    %25 = sbr.rel (0) target = $region25
  $region24: #{qnetwork5_forward.1} parent=0 // pred_region
    _
  $region25: #{qnetwork5_forward.1} parent=0 // pred_fallthru
    _
  // Predicated region
  $region26: #{qnetwork5_forward.1} parent=0 // pred_check
    _
  $region27: #{qnetwork5_forward.1} parent=0 // pred_check_branch
    %27 = sbr.rel (0) target = $region29
  $region28: #{qnetwork5_forward.1} parent=0 // pred_region
    _
  $region29: #{qnetwork5_forward.1} parent=0 // pred_fallthru
    _
  // Predicated region
  $region30: #{qnetwork5_forward.1} parent=0 // pred_check
    _
  $region31: #{qnetwork5_forward.1} parent=0 // pred_check_branch
    %29 = sbr.rel (0) target = $region33
  $region32: #{qnetwork5_forward.1} parent=0 // pred_region
    _
  $region33: #{qnetwork5_forward.1} parent=0 // pred_fallthru
    _
  // Predicated region
  $region34: #{qnetwork5_forward.1} parent=0 // pred_check
    _
  $region35: #{qnetwork5_forward.1} parent=0 // pred_check_branch
    %31 = sbr.rel (0) target = $region37
  $region36: #{qnetwork5_forward.1} parent=0 // pred_region
    _
  $region37: #{qnetwork5_forward.1} parent=0 // pred_fallthru
    _
  %v33 = vld [vmem:[%s0] sm:$0xf]
  %v34 = vld [vmem:[%s1] sm:$0xf]
  %v35 = vld [vmem:[%s1 + $0x4] sm:$0xf]
  %v36 = vld [vmem:[%s1 + $0x8] sm:$0xf]
  %v37 = vld [vmem:[%s1 + $0xc] sm:$0xf]
  %v38 = vld [vmem:[%s1 + $0x10] sm:$0xf]
  %v39 = vld [vmem:[%s1 + $0x14] sm:$0xf]
  %v40 = vld [vmem:[%s1 + $0x18] sm:$0xf]
  %v41 = vld [vmem:[%s1 + $0x1c] sm:$0xf]
  %v42 = vld [vmem:[%s1 + $0x20] sm:$0xf]
  %v43 = vld [vmem:[%s1 + $0x24] sm:$0xf]
  %v44 = vld [vmem:[%s1 + $0x28] sm:$0xf]
  %v45 = vld [vmem:[%s1 + $0x2c] sm:$0xf]
  %v46 = vld [vmem:[%s1 + $0x30] sm:$0xf]
  %v47 = vld [vmem:[%s1 + $0x34] sm:$0xf]
  %v48 = vld [vmem:[%s1 + $0x38] sm:$0xf]
  %v49 = vld [vmem:[%s1 + $0x3c] sm:$0xf]
  %v50 = vld [vmem:[%s2] sm:$0x1]
  %v52 = vlaneseq
  %v53 = vshrl.u32 %v52, 7
  %v54 = vsub.s32 0, %v53
  %v55 = vrot.slane %v50, %v54
  %v73 = vunpack.c.l.b16 %v34
  %v74 = vunpack.c.l.b16 %v35
  %v75 = vunpack.c.l.b16 %v36
  %v76 = vunpack.c.l.b16 %v37
  %v77 = vunpack.c.l.b16 %v38
  %v78 = vunpack.c.l.b16 %v39
  %v79 = vunpack.c.l.b16 %v40
  %v80 = vunpack.c.l.b16 %v41
  %v81 = vunpack.c.l.b16 %v42
  %v82 = vunpack.c.l.b16 %v43
  %v83 = vunpack.c.l.b16 %v44
  %v84 = vunpack.c.l.b16 %v45
  %v85 = vunpack.c.l.b16 %v46
  %v86 = vunpack.c.l.b16 %v47
  %v87 = vunpack.c.l.b16 %v48
  %v88 = vunpack.c.l.b16 %v49
  %v89 = vpack.c.b16 %v74, %v73
  %v90 = vpack.c.b16 %v76, %v75
  %v91 = vpack.c.b16 %v78, %v77
  %v92 = vpack.c.b16 %v80, %v79
  %v93 = vpack.c.b16 %v82, %v81
  %v94 = vpack.c.b16 %v84, %v83
  %v95 = vpack.c.b16 %v86, %v85
  %v96 = vpack.c.b16 %v88, %v87
  %105 = vmatprep.subr.bf16.mxu0 0
  %106 = vmatpush1.bf16.msra.mxu0 %v96
  %107 = vmatprep.subr.bf16.mxu0 0
  %108 = vmatpush1.bf16.msra.mxu0 %v95
  %109 = vmatprep.subr.bf16.mxu0 0
  %110 = vmatpush1.bf16.msra.mxu0 %v94
  %111 = vmatprep.subr.bf16.mxu0 0
  %112 = vmatpush1.bf16.msra.mxu0 %v93
  %113 = vmatprep.subr.bf16.mxu0 0
  %114 = vmatpush1.bf16.msra.mxu0 %v92
  %115 = vmatprep.subr.bf16.mxu0 0
  %116 = vmatpush1.bf16.msra.mxu0 %v91
  %117 = vmatprep.subr.bf16.mxu0 0
  %118 = vmatpush1.bf16.msra.mxu0 %v90
  %119 = vmatprep.subr.bf16.mxu0 0
  %120 = vmatpush1.bf16.msra.mxu0 %v89
  %121 = vmatprep.subr.bf16.mxu0 0
  %122 = vmatpush2.bf16.msra.mxu0 0
  %123 = vmatprep.subr.bf16.mxu0 0
  %124 = vmatpush2.bf16.msra.mxu0 0
  %125 = vmatprep.subr.bf16.mxu0 0
  %126 = vmatpush2.bf16.msra.mxu0 0
  %127 = vmatprep.subr.bf16.mxu0 0
  %128 = vmatpush2.bf16.msra.mxu0 0
  %129 = vmatprep.subr.bf16.mxu0 0
  %130 = vmatpush2.bf16.msra.mxu0 0
  %131 = vmatprep.subr.bf16.mxu0 0
  %132 = vmatpush2.bf16.msra.mxu0 0
  %133 = vmatprep.subr.bf16.mxu0 0
  %134 = vmatpush2.bf16.msra.mxu0 0
  %135 = vmatprep.subr.bf16.mxu0 0
  %136 = vmatpush2.bf16.msra.mxu0 0
  %137 = vmatprep.mubr.bf16.mxu0 0
  %138 = vmatmul.mubr.bf16.gmra.mxu0 %v33
  %v139 = vpop.f32.mrf.mxu0
  %v140 = vadd.f32 %v55, %v139
  %v141 = vpop.f32.mrf.mxu0
  %v142 = vpop.f32.mrf.mxu0
  %v143 = vpop.f32.mrf.mxu0
  %144 = vdwg.mxu0
  %v145 = vmax.f32 %v140, 0.0
  %v146 = vpack.c.bf16 %v145, %v145
  %v147 = vld [vmem:[%s3] sm:$0xf]
  %v148 = vld [vmem:[%s3 + $0x4] sm:$0xf]
  %v149 = vld [vmem:[%s3 + $0x8] sm:$0xf]
  %v150 = vld [vmem:[%s3 + $0xc] sm:$0xf]
  %v151 = vld [vmem:[%s3 + $0x10] sm:$0xf]
  %v152 = vld [vmem:[%s3 + $0x14] sm:$0xf]
  %v153 = vld [vmem:[%s3 + $0x18] sm:$0xf]
  %v154 = vld [vmem:[%s3 + $0x1c] sm:$0xf]
  %v155 = vld [vmem:[%s3 + $0x20] sm:$0xf]
  %v156 = vld [vmem:[%s3 + $0x24] sm:$0xf]
  %v157 = vld [vmem:[%s3 + $0x28] sm:$0xf]
  %v158 = vld [vmem:[%s3 + $0x2c] sm:$0xf]
  %v159 = vld [vmem:[%s3 + $0x30] sm:$0xf]
  %v160 = vld [vmem:[%s3 + $0x34] sm:$0xf]
  %v161 = vld [vmem:[%s3 + $0x38] sm:$0xf]
  %v162 = vld [vmem:[%s3 + $0x3c] sm:$0xf]
  %v163 = vld [vmem:[%s4] sm:$0x1]
  %v165 = vlaneseq
  %v166 = vshrl.u32 %v165, 7
  %v167 = vsub.s32 0, %v166
  %v168 = vrot.slane %v163, %v167
  %v186 = vunpack.c.l.b16 %v147
  %v187 = vunpack.c.l.b16 %v148
  %v188 = vunpack.c.l.b16 %v149
  %v189 = vunpack.c.l.b16 %v150
  %v190 = vunpack.c.l.b16 %v151
  %v191 = vunpack.c.l.b16 %v152
  %v192 = vunpack.c.l.b16 %v153
  %v193 = vunpack.c.l.b16 %v154
  %v194 = vunpack.c.l.b16 %v155
  %v195 = vunpack.c.l.b16 %v156
  %v196 = vunpack.c.l.b16 %v157
  %v197 = vunpack.c.l.b16 %v158
  %v198 = vunpack.c.l.b16 %v159
  %v199 = vunpack.c.l.b16 %v160
  %v200 = vunpack.c.l.b16 %v161
  %v201 = vunpack.c.l.b16 %v162
  %v202 = vpack.c.b16 %v187, %v186
  %v203 = vpack.c.b16 %v189, %v188
  %v204 = vpack.c.b16 %v191, %v190
  %v205 = vpack.c.b16 %v193, %v192
  %v206 = vpack.c.b16 %v195, %v194
  %v207 = vpack.c.b16 %v197, %v196
  %v208 = vpack.c.b16 %v199, %v198
  %v209 = vpack.c.b16 %v201, %v200
  %218 = vmatprep.subr.bf16.mxu0 0
  %219 = vmatpush1.bf16.msra.mxu0 %v209
  %220 = vmatprep.subr.bf16.mxu0 0
  %221 = vmatpush1.bf16.msra.mxu0 %v208
  %222 = vmatprep.subr.bf16.mxu0 0
  %223 = vmatpush1.bf16.msra.mxu0 %v207
  %224 = vmatprep.subr.bf16.mxu0 0
  %225 = vmatpush1.bf16.msra.mxu0 %v206
  %226 = vmatprep.subr.bf16.mxu0 0
  %227 = vmatpush1.bf16.msra.mxu0 %v205
  %228 = vmatprep.subr.bf16.mxu0 0
  %229 = vmatpush1.bf16.msra.mxu0 %v204
  %230 = vmatprep.subr.bf16.mxu0 0
  %231 = vmatpush1.bf16.msra.mxu0 %v203
  %232 = vmatprep.subr.bf16.mxu0 0
  %233 = vmatpush1.bf16.msra.mxu0 %v202
  %234 = vmatprep.subr.bf16.mxu0 0
  %235 = vmatpush2.bf16.msra.mxu0 0
  %236 = vmatprep.subr.bf16.mxu0 0
  %237 = vmatpush2.bf16.msra.mxu0 0
  %238 = vmatprep.subr.bf16.mxu0 0
  %239 = vmatpush2.bf16.msra.mxu0 0
  %240 = vmatprep.subr.bf16.mxu0 0
  %241 = vmatpush2.bf16.msra.mxu0 0
  %242 = vmatprep.subr.bf16.mxu0 0
  %243 = vmatpush2.bf16.msra.mxu0 0
  %244 = vmatprep.subr.bf16.mxu0 0
  %245 = vmatpush2.bf16.msra.mxu0 0
  %246 = vmatprep.subr.bf16.mxu0 0
  %247 = vmatpush2.bf16.msra.mxu0 0
  %248 = vmatprep.subr.bf16.mxu0 0
  %249 = vmatpush2.bf16.msra.mxu0 0
  %250 = vmatprep.mubr.bf16.mxu0 0
  %251 = vmatmul.mubr.bf16.gmra.mxu0 %v146
  %v252 = vpop.f32.mrf.mxu0
  %v253 = vadd.f32 %v168, %v252
  %v254 = vpop.f32.mrf.mxu0
  %v255 = vpop.f32.mrf.mxu0
  %v256 = vpop.f32.mrf.mxu0
  %257 = vdwg.mxu0
  %v258 = vmax.f32 %v253, 0.0
  %v259 = vpack.c.bf16 %v258, %v258
  %v260 = vld [vmem:[%s5] sm:$0xf]
  %v261 = vld [vmem:[%s5 + $0x4] sm:$0xf]
  %v262 = vld [vmem:[%s5 + $0x8] sm:$0xf]
  %v263 = vld [vmem:[%s5 + $0xc] sm:$0xf]
  %v264 = vld [vmem:[%s5 + $0x10] sm:$0xf]
  %v265 = vld [vmem:[%s5 + $0x14] sm:$0xf]
  %v266 = vld [vmem:[%s5 + $0x18] sm:$0xf]
  %v267 = vld [vmem:[%s5 + $0x1c] sm:$0xf]
  %v268 = vld [vmem:[%s5 + $0x20] sm:$0xf]
  %v269 = vld [vmem:[%s5 + $0x24] sm:$0xf]
  %v270 = vld [vmem:[%s5 + $0x28] sm:$0xf]
  %v271 = vld [vmem:[%s5 + $0x2c] sm:$0xf]
  %v272 = vld [vmem:[%s5 + $0x30] sm:$0xf]
  %v273 = vld [vmem:[%s5 + $0x34] sm:$0xf]
  %v274 = vld [vmem:[%s5 + $0x38] sm:$0xf]
  %v275 = vld [vmem:[%s5 + $0x3c] sm:$0xf]
  %v276 = vld [vmem:[%s6] sm:$0x1]
  %v278 = vlaneseq
  %v279 = vshrl.u32 %v278, 7
  %v280 = vsub.s32 0, %v279
  %v281 = vrot.slane %v276, %v280
  %v299 = vunpack.c.l.b16 %v260
  %v300 = vunpack.c.l.b16 %v261
  %v301 = vunpack.c.l.b16 %v262
  %v302 = vunpack.c.l.b16 %v263
  %v303 = vunpack.c.l.b16 %v264
  %v304 = vunpack.c.l.b16 %v265
  %v305 = vunpack.c.l.b16 %v266
  %v306 = vunpack.c.l.b16 %v267
  %v307 = vunpack.c.l.b16 %v268
  %v308 = vunpack.c.l.b16 %v269
  %v309 = vunpack.c.l.b16 %v270
  %v310 = vunpack.c.l.b16 %v271
  %v311 = vunpack.c.l.b16 %v272
  %v312 = vunpack.c.l.b16 %v273
  %v313 = vunpack.c.l.b16 %v274
  %v314 = vunpack.c.l.b16 %v275
  %v315 = vpack.c.b16 %v300, %v299
  %v316 = vpack.c.b16 %v302, %v301
  %v317 = vpack.c.b16 %v304, %v303
  %v318 = vpack.c.b16 %v306, %v305
  %v319 = vpack.c.b16 %v308, %v307
  %v320 = vpack.c.b16 %v310, %v309
  %v321 = vpack.c.b16 %v312, %v311
  %v322 = vpack.c.b16 %v314, %v313
  %331 = vmatprep.subr.bf16.mxu0 0
  %332 = vmatpush1.bf16.msra.mxu0 %v322
  %333 = vmatprep.subr.bf16.mxu0 0
  %334 = vmatpush1.bf16.msra.mxu0 %v321
  %335 = vmatprep.subr.bf16.mxu0 0
  %336 = vmatpush1.bf16.msra.mxu0 %v320
  %337 = vmatprep.subr.bf16.mxu0 0
  %338 = vmatpush1.bf16.msra.mxu0 %v319
  %339 = vmatprep.subr.bf16.mxu0 0
  %340 = vmatpush1.bf16.msra.mxu0 %v318
  %341 = vmatprep.subr.bf16.mxu0 0
  %342 = vmatpush1.bf16.msra.mxu0 %v317
  %343 = vmatprep.subr.bf16.mxu0 0
  %344 = vmatpush1.bf16.msra.mxu0 %v316
  %345 = vmatprep.subr.bf16.mxu0 0
  %346 = vmatpush1.bf16.msra.mxu0 %v315
  %347 = vmatprep.subr.bf16.mxu0 0
  %348 = vmatpush2.bf16.msra.mxu0 0
  %349 = vmatprep.subr.bf16.mxu0 0
  %350 = vmatpush2.bf16.msra.mxu0 0
  %351 = vmatprep.subr.bf16.mxu0 0
  %352 = vmatpush2.bf16.msra.mxu0 0
  %353 = vmatprep.subr.bf16.mxu0 0
  %354 = vmatpush2.bf16.msra.mxu0 0
  %355 = vmatprep.subr.bf16.mxu0 0
  %356 = vmatpush2.bf16.msra.mxu0 0
  %357 = vmatprep.subr.bf16.mxu0 0
  %358 = vmatpush2.bf16.msra.mxu0 0
  %359 = vmatprep.subr.bf16.mxu0 0
  %360 = vmatpush2.bf16.msra.mxu0 0
  %361 = vmatprep.subr.bf16.mxu0 0
  %362 = vmatpush2.bf16.msra.mxu0 0
  %363 = vmatprep.mubr.bf16.mxu0 0
  %364 = vmatmul.mubr.bf16.gmra.mxu0 %v259
  %v365 = vpop.f32.mrf.mxu0
  %v366 = vadd.f32 %v281, %v365
  %v367 = vpop.f32.mrf.mxu0
  %v368 = vpop.f32.mrf.mxu0
  %v369 = vpop.f32.mrf.mxu0
  %370 = vdwg.mxu0
  %v371 = vmax.f32 %v366, 0.0
  %v372 = vpack.c.bf16 %v371, %v371
  %v373 = vld [vmem:[%s7] sm:$0xf]
  %v374 = vld [vmem:[%s7 + $0x4] sm:$0xf]
  %v375 = vld [vmem:[%s7 + $0x8] sm:$0xf]
  %v376 = vld [vmem:[%s7 + $0xc] sm:$0xf]
  %v377 = vld [vmem:[%s7 + $0x10] sm:$0xf]
  %v378 = vld [vmem:[%s7 + $0x14] sm:$0xf]
  %v379 = vld [vmem:[%s7 + $0x18] sm:$0xf]
  %v380 = vld [vmem:[%s7 + $0x1c] sm:$0xf]
  %v381 = vld [vmem:[%s7 + $0x20] sm:$0xf]
  %v382 = vld [vmem:[%s7 + $0x24] sm:$0xf]
  %v383 = vld [vmem:[%s7 + $0x28] sm:$0xf]
  %v384 = vld [vmem:[%s7 + $0x2c] sm:$0xf]
  %v385 = vld [vmem:[%s7 + $0x30] sm:$0xf]
  %v386 = vld [vmem:[%s7 + $0x34] sm:$0xf]
  %v387 = vld [vmem:[%s7 + $0x38] sm:$0xf]
  %v388 = vld [vmem:[%s7 + $0x3c] sm:$0xf]
  %v389 = vld [vmem:[%s8] sm:$0x1]
  %v391 = vlaneseq
  %v392 = vshrl.u32 %v391, 7
  %v393 = vsub.s32 0, %v392
  %v394 = vrot.slane %v389, %v393
  %v412 = vunpack.c.l.b16 %v373
  %v413 = vunpack.c.l.b16 %v374
  %v414 = vunpack.c.l.b16 %v375
  %v415 = vunpack.c.l.b16 %v376
  %v416 = vunpack.c.l.b16 %v377
  %v417 = vunpack.c.l.b16 %v378
  %v418 = vunpack.c.l.b16 %v379
  %v419 = vunpack.c.l.b16 %v380
  %v420 = vunpack.c.l.b16 %v381
  %v421 = vunpack.c.l.b16 %v382
  %v422 = vunpack.c.l.b16 %v383
  %v423 = vunpack.c.l.b16 %v384
  %v424 = vunpack.c.l.b16 %v385
  %v425 = vunpack.c.l.b16 %v386
  %v426 = vunpack.c.l.b16 %v387
  %v427 = vunpack.c.l.b16 %v388
  %v428 = vpack.c.b16 %v413, %v412
  %v429 = vpack.c.b16 %v415, %v414
  %v430 = vpack.c.b16 %v417, %v416
  %v431 = vpack.c.b16 %v419, %v418
  %v432 = vpack.c.b16 %v421, %v420
  %v433 = vpack.c.b16 %v423, %v422
  %v434 = vpack.c.b16 %v425, %v424
  %v435 = vpack.c.b16 %v427, %v426
  %444 = vmatprep.subr.bf16.mxu0 0
  %445 = vmatpush1.bf16.msra.mxu0 %v435
  %446 = vmatprep.subr.bf16.mxu0 0
  %447 = vmatpush1.bf16.msra.mxu0 %v434
  %448 = vmatprep.subr.bf16.mxu0 0
  %449 = vmatpush1.bf16.msra.mxu0 %v433
  %450 = vmatprep.subr.bf16.mxu0 0
  %451 = vmatpush1.bf16.msra.mxu0 %v432
  %452 = vmatprep.subr.bf16.mxu0 0
  %453 = vmatpush1.bf16.msra.mxu0 %v431
  %454 = vmatprep.subr.bf16.mxu0 0
  %455 = vmatpush1.bf16.msra.mxu0 %v430
  %456 = vmatprep.subr.bf16.mxu0 0
  %457 = vmatpush1.bf16.msra.mxu0 %v429
  %458 = vmatprep.subr.bf16.mxu0 0
  %459 = vmatpush1.bf16.msra.mxu0 %v428
  %460 = vmatprep.subr.bf16.mxu0 0
  %461 = vmatpush2.bf16.msra.mxu0 0
  %462 = vmatprep.subr.bf16.mxu0 0
  %463 = vmatpush2.bf16.msra.mxu0 0
  %464 = vmatprep.subr.bf16.mxu0 0
  %465 = vmatpush2.bf16.msra.mxu0 0
  %466 = vmatprep.subr.bf16.mxu0 0
  %467 = vmatpush2.bf16.msra.mxu0 0
  %468 = vmatprep.subr.bf16.mxu0 0
  %469 = vmatpush2.bf16.msra.mxu0 0
  %470 = vmatprep.subr.bf16.mxu0 0
  %471 = vmatpush2.bf16.msra.mxu0 0
  %472 = vmatprep.subr.bf16.mxu0 0
  %473 = vmatpush2.bf16.msra.mxu0 0
  %474 = vmatprep.subr.bf16.mxu0 0
  %475 = vmatpush2.bf16.msra.mxu0 0
  %476 = vmatprep.mubr.bf16.mxu0 0
  %477 = vmatmul.mubr.bf16.gmra.mxu0 %v372
  %v478 = vpop.f32.mrf.mxu0
  %v479 = vadd.f32 %v394, %v478
  %v480 = vpop.f32.mrf.mxu0
  %v481 = vpop.f32.mrf.mxu0
  %v482 = vpop.f32.mrf.mxu0
  %483 = vdwg.mxu0
  %484 = vst [vmem:[%s9] sm:$0xff] %v479
  // Predicated region
  $region38: #{qnetwork5_forward.1} parent=0 // pred_check
    _
  $region39: #{qnetwork5_forward.1} parent=0 // pred_check_branch
    %486 = sbr.rel (0) target = $region41
  $region40: #{qnetwork5_forward.1} parent=0 // pred_region
    _
  $region41: #{qnetwork5_forward.1} parent=0 // pred_fallthru
    _
  // Predicated region
  $region42: #{qnetwork5_forward.1} parent=0 // pred_check
    _
  $region43: #{qnetwork5_forward.1} parent=0 // pred_check_branch
    %488 = sbr.rel (0) target = $region45
  $region44: #{qnetwork5_forward.1} parent=0 // pred_region
    _
  $region45: #{qnetwork5_forward.1} parent=0 // pred_fallthru
    _

</llo_original>
